<compile_context>
chip_gen: v6e
topology: v6e:2x2x1
jax: 0.10.0
libtpu: 0.0.40
codegen_flags: <defaults>
</compile_context>

<pallas_src>
import functools

import jax
import jax.numpy as jnp
from jax.experimental import pallas as pl
from jax.experimental.pallas import tpu as pltpu


def _round_up(x: int, m: int) -> int:
    return ((x + m - 1) // m) * m


def _sublane(itemsize: int) -> int:
    # 8 sublanes for 4-byte dtypes, 16 for 2-byte, 32 for 1-byte.
    return max(8, 32 // itemsize)


def _vmem_tile_bytes(rows: int, cols: int, itemsize: int) -> int:
    # VMEM layout pads the last dim to 128 lanes and the second-to-last dim to
    # the dtype's sublane count.
    return (_round_up(max(rows, 1), _sublane(itemsize))
            * _round_up(max(cols, 1), 128) * itemsize)


def _physical_vmem_bytes() -> int:
    try:
        return int(pltpu.get_tpu_info().vmem_capacity_bytes)
    except Exception:
        return 64 << 20   # conservative: v7x has 64 MiB per TensorCore


def _deepsets_tile_kernel(x_ref, wc_ref, beff_ref, o_ref, *, activation):
    # x_ref:    [TILE_N, D_in]   one row-tile of X
    # wc_ref:   [D_in,  D_out]   resident across the whole grid
    # beff_ref: [1,     D_out]   b_curr + sum(X,0) @ W_all (precomputed, f32)
    # o_ref:    [TILE_N, D_out]
    z = jnp.dot(x_ref[...], wc_ref[...], preferred_element_type=jnp.float32)
    z = z + beff_ref[...]                      # broadcast [1, D_out]
    if activation == "tanh":
        z = jnp.tanh(z)                        # f32 activation (safe on v5e)
    elif activation == "relu":
        z = jnp.maximum(z, 0.0)
    # else: identity
    o_ref[...] = z.astype(o_ref.dtype)


def deepsets_layer(x, w_curr, b_curr, w_all, *, activation="relu", tile_n=None):
    """DeepSets layer forward.

    x:      [N, D_in]
    w_curr: [D_in, D_out]          (fc_curr weight, pre-transposed)
    b_curr: [D_out] or [1, D_out]  (fc_curr bias)
    w_all:  [D_in, D_out]          (fc_all weight, pre-transposed, no bias)
    returns [N, D_out] in x.dtype
    """
    N, D_in = x.shape
    D_out = w_curr.shape[1]
    b_curr = jnp.reshape(b_curr, (1, D_out))

    # ---- Fold the set-sum branch into an effective bias (once, in f32). ----
    x_sum = jnp.sum(x, axis=0, keepdims=True, dtype=jnp.float32)      # [1, D_in]
    b_eff = b_curr.astype(jnp.float32) + x_sum @ w_all.astype(jnp.float32)

    # ---- Tile sizing against the VMEM budget (no HBM-side padding). ----
    x_it = jnp.dtype(x.dtype).itemsize
    w_it = jnp.dtype(w_curr.dtype).itemsize
    o_it = x_it
    sub = _sublane(x_it)

    resident = (_vmem_tile_bytes(D_in, D_out, w_it)
                + _vmem_tile_bytes(1, D_out, 4))

    def buffers_bytes(t, nbuf_x):
        return (nbuf_x * _vmem_tile_bytes(t, D_in, x_it)
                + 2 * _vmem_tile_bytes(t, D_out, o_it))

    phys_vmem = _physical_vmem_bytes()
    budget = int(phys_vmem * 0.7)

    if tile_n is None:
        # Bigger tiles when they comfortably fit (amortize the ~0.35us/step
        # grid overhead); 512 rows is already near the HBM roofline.
        tile_n = 1024 if resident + buffers_bytes(1024, 2) <= budget // 2 else 512
    tile_n = max(sub, (int(tile_n) // sub) * sub)        # sublane-aligned
    while tile_n > sub and resident + buffers_bytes(tile_n, 2) > budget:
        tile_n = max(sub, ((tile_n // 2) // sub) * sub)
    if tile_n >= N:
        tile_n = N        # single tile; block dim == full array dim is legal
    num_tiles = pl.cdiv(N, tile_n)

    have_buffered = hasattr(pl, "Buffered")
    # Third X buffer only when there is both headroom and a long enough grid.
    nbuf_x = 3 if (have_buffered and num_tiles >= 3
                   and resident + buffers_bytes(tile_n, 3) <= budget) else 2

    kernel = functools.partial(_deepsets_tile_kernel, activation=activation)

    def run(single_buffer_resident):
        resident_mult = 1 if single_buffer_resident else 2
        needed = resident * resident_mult + buffers_bytes(tile_n, nbuf_x)
        vmem_limit = int(min(phys_vmem,
                             max(needed * 3 // 2 + (2 << 20), 32 << 20)))
        res_kw = ({"pipeline_mode": pl.Buffered(1)}
                  if (single_buffer_resident and have_buffered) else {})
        x_kw = {"pipeline_mode": pl.Buffered(3)} if nbuf_x == 3 else {}
        return pl.pallas_call(
            kernel,
            out_shape=jax.ShapeDtypeStruct((N, D_out), x.dtype),
            grid=(num_tiles,),
            in_specs=[
                pl.BlockSpec((tile_n, D_in), lambda i: (i, 0), **x_kw),   # X tile
                pl.BlockSpec((D_in, D_out), lambda i: (0, 0), **res_kw),  # W_curr
                pl.BlockSpec((1, D_out), lambda i: (0, 0), **res_kw),     # b_eff
            ],
            out_specs=pl.BlockSpec((tile_n, D_out), lambda i: (i, 0)),
            compiler_params=pltpu.CompilerParams(
                dimension_semantics=("parallel",),   # shard rows across TCs
                vmem_limit_bytes=vmem_limit,
            ),
        )(x, w_curr, b_eff)

    try:
        # Keep W_curr / b_eff single-buffered (constant index_map -> resident).
        return run(True)
    except Exception:
        # Some jax versions may reject buffer_count=1; default pipelining works.
        return run(False)


def _reference(x, w_curr, b_curr, w_all, activation):
    z = (x @ w_curr + jnp.reshape(b_curr, (1, -1))
         + jnp.sum(x, axis=0, keepdims=True) @ w_all)
    if activation == "tanh":
        return jnp.tanh(z)
    if activation == "relu":
        return jnp.maximum(z, 0.0)
    return z


def _run_case(key, N, D_in, D_out, activation, tile_n=None,
              atol=1e-4, rtol=1e-5):
    kx, kwc, kbc, kwa = jax.random.split(key, 4)
    bound = 1.0 / (D_in ** 0.5)
    x = jax.random.normal(kx, (N, D_in), dtype=jnp.float32)
    w_curr = jax.random.uniform(kwc, (D_in, D_out), jnp.float32, -bound, bound)
    b_curr = jax.random.uniform(kbc, (D_out,), jnp.float32, -bound, bound)
    w_all = jax.random.uniform(kwa, (D_in, D_out), jnp.float32, -bound, bound)

    out = deepsets_layer(x, w_curr, b_curr, w_all,
                         activation=activation, tile_n=tile_n)
    out = jax.block_until_ready(out)

    ref = _reference(x, w_curr, b_curr, w_all, activation)
    assert out.shape == (N, D_out)
    assert out.dtype == x.dtype
    assert jnp.allclose(out, ref, atol=atol, rtol=rtol), (
        f"mismatch vs reference for N={N}, D_in={D_in}, D_out={D_out}, "
        f"activation={activation}")


if __name__ == "__main__":
    key = jax.random.PRNGKey(0)
    k1, k2, k3 = jax.random.split(key, 3)

    # Case 1: tiny, single grid step, relu, unaligned D_in/D_out, no padding.
    _run_case(k1, N=16, D_in=32, D_out=64, activation="relu")
    # Case 2: multi-tile grid with a ragged last row-tile and a masked-lane
    #         output (D_out=96 < 128), tanh, triple-buffered X path.
    _run_case(k2, N=300, D_in=48, D_out=96, activation="tanh", tile_n=128)
    # Case 3: identity activation, single full-dim row tile (N=257, not a
    #         multiple of 8), lane-aligned D_out.
    _run_case(k3, N=257, D_in=40, D_out=128, activation="none")

    print("KERNEL_OK")
</pallas_src>

<mosaic_0001>
module attributes {stable_mosaic.version = 11 : i64} {
  func.func @_deepsets_tile_kernel(%arg0: i32, %arg1: memref<16x32xf32, #tpu.memory_space<vmem>>, %arg2: memref<32x64xf32, #tpu.memory_space<vmem>>, %arg3: memref<1x64xf32, #tpu.memory_space<vmem>>, %arg4: memref<16x64xf32, #tpu.memory_space<vmem>>) attributes {dimension_semantics = [#tpu.dimension_semantics<parallel>], iteration_bounds = array<i64: 1>, scalar_prefetch = 0 : i64, scratch_operands = 0 : i64, tpu.core_type = #tpu.core_type<tc>, window_params = [{transform_indices = @transform_0, window_bounds = array<i64: 16, 32>}, {pipeline_mode = #tpu.pipeline_mode<synchronous>, transform_indices = @transform_1, window_bounds = array<i64: 32, 64>}, {pipeline_mode = #tpu.pipeline_mode<synchronous>, transform_indices = @transform_2, window_bounds = array<i64: 1, 64>}, {transform_indices = @transform_3, window_bounds = array<i64: 16, 64>}]} {
    %c0 = arith.constant 0 : index
    %c0_0 = arith.constant 0 : index
    %0 = vector.load %arg1[%c0, %c0_0] : memref<16x32xf32, #tpu.memory_space<vmem>>, vector<16x32xf32>
    %c0_1 = arith.constant 0 : index
    %c0_2 = arith.constant 0 : index
    %1 = vector.load %arg2[%c0_1, %c0_2] : memref<32x64xf32, #tpu.memory_space<vmem>>, vector<32x64xf32>
    %cst = arith.constant dense<0.000000e+00> : vector<16x64xf32>
    %2 = tpu.matmul %0, %1, %cst {dimension_numbers = #tpu.dot_dimension_numbers<[1], [0], [0], [1], [0, 0, 1, 1], [], []>} : vector<16x32xf32>, vector<32x64xf32>, vector<16x64xf32> -> vector<16x64xf32>
    %c0_3 = arith.constant 0 : index
    %c0_4 = arith.constant 0 : index
    %3 = vector.load %arg3[%c0_3, %c0_4] : memref<1x64xf32, #tpu.memory_space<vmem>>, vector<1x64xf32>
    %4 = vector.broadcast %3 : vector<1x64xf32> to vector<16x64xf32>
    %5 = arith.addf %2, %4 : vector<16x64xf32>
    %cst_5 = arith.constant 0.000000e+00 : f32
    %6 = vector.broadcast %cst_5 : f32 to vector<16x64xf32>
    %7 = arith.maximumf %5, %6 : vector<16x64xf32>
    %c0_6 = arith.constant 0 : index
    %c0_7 = arith.constant 0 : index
    %8 = vector.load %arg4[%c0_6, %c0_7] : memref<16x64xf32, #tpu.memory_space<vmem>>, vector<16x64xf32>
    tpu.vector_store %arg4[%c0_6, %c0_7], %7 {strides = array<i32>} : memref<16x64xf32, #tpu.memory_space<vmem>>, vector<16x64xf32>,
    return
  }
  func.func @transform_0(%arg0: i32) -> (i32, i32) {
    %c0_i32 = arith.constant 0 : i32
    %c0_i32_0 = arith.constant 0 : i32
    return %arg0, %c0_i32 : i32, i32
  }
  func.func @transform_1(%arg0: i32) -> (i32, i32) {
    %c0_i32 = arith.constant 0 : i32
    %c0_i32_0 = arith.constant 0 : i32
    %c0_i32_1 = arith.constant 0 : i32
    return %c0_i32, %c0_i32_0 : i32, i32
  }
  func.func @transform_2(%arg0: i32) -> (i32, i32) {
    %c0_i32 = arith.constant 0 : i32
    %c0_i32_0 = arith.constant 0 : i32
    %c0_i32_1 = arith.constant 0 : i32
    return %c0_i32, %c0_i32_0 : i32, i32
  }
  func.func @transform_3(%arg0: i32) -> (i32, i32) {
    %c0_i32 = arith.constant 0 : i32
    %c0_i32_0 = arith.constant 0 : i32
    return %arg0, %c0_i32 : i32, i32
  }
}

module attributes {stable_mosaic.version = 11 : i64} {
  func.func @_deepsets_tile_kernel(%arg0: i32, %arg1: memref<16x32xf32, #tpu.memory_space<vmem>>, %arg2: memref<32x64xf32, #tpu.memory_space<vmem>>, %arg3: memref<1x64xf32, #tpu.memory_space<vmem>>, %arg4: memref<16x64xf32, #tpu.memory_space<vmem>>) attributes {dimension_semantics = [#tpu.dimension_semantics<parallel>], iteration_bounds = array<i64: 1>, scalar_prefetch = 0 : i64, scratch_operands = 0 : i64, tpu.core_type = #tpu.core_type<tc>, window_params = [{transform_indices = @transform_0, window_bounds = array<i64: 16, 32>}, {pipeline_mode = #tpu.pipeline_mode<synchronous>, transform_indices = @transform_1, window_bounds = array<i64: 32, 64>}, {pipeline_mode = #tpu.pipeline_mode<synchronous>, transform_indices = @transform_2, window_bounds = array<i64: 1, 64>}, {transform_indices = @transform_3, window_bounds = array<i64: 16, 64>}]} {
    %c0 = arith.constant 0 : index
    %c0_0 = arith.constant 0 : index
    %0 = vector.load %arg1[%c0, %c0_0] : memref<16x32xf32, #tpu.memory_space<vmem>>, vector<16x32xf32>
    %c0_1 = arith.constant 0 : index
    %c0_2 = arith.constant 0 : index
    %1 = vector.load %arg2[%c0_1, %c0_2] : memref<32x64xf32, #tpu.memory_space<vmem>>, vector<32x64xf32>
    %cst = arith.constant dense<0.000000e+00> : vector<16x64xf32>
    %2 = tpu.matmul %0, %1, %cst {dimension_numbers = #tpu.dot_dimension_numbers<[1], [0], [0], [1], [0, 0, 1, 1], [], []>} : vector<16x32xf32>, vector<32x64xf32>, vector<16x64xf32> -> vector<16x64xf32>
    %c0_3 = arith.constant 0 : index
    %c0_4 = arith.constant 0 : index
    %3 = vector.load %arg3[%c0_3, %c0_4] : memref<1x64xf32, #tpu.memory_space<vmem>>, vector<1x64xf32>
    %4 = vector.broadcast %3 : vector<1x64xf32> to vector<16x64xf32>
    %5 = arith.addf %2, %4 : vector<16x64xf32>
    %cst_5 = arith.constant 0.000000e+00 : f32
    %6 = vector.broadcast %cst_5 : f32 to vector<16x64xf32>
    %7 = arith.maximumf %5, %6 : vector<16x64xf32>
    %c0_6 = arith.constant 0 : index
    %c0_7 = arith.constant 0 : index
    %8 = vector.load %arg4[%c0_6, %c0_7] : memref<16x64xf32, #tpu.memory_space<vmem>>, vector<16x64xf32>
    tpu.vector_store %arg4[%c0_6, %c0_7], %7 {strides = array<i32>} : memref<16x64xf32, #tpu.memory_space<vmem>>, vector<16x64xf32>,
    return
  }
  func.func @transform_0(%arg0: i32) -> (i32, i32) {
    %c0_i32 = arith.constant 0 : i32
    %c0_i32_0 = arith.constant 0 : i32
    return %arg0, %c0_i32 : i32, i32
  }
  func.func @transform_1(%arg0: i32) -> (i32, i32) {
    %c0_i32 = arith.constant 0 : i32
    %c0_i32_0 = arith.constant 0 : i32
    %c0_i32_1 = arith.constant 0 : i32
    return %c0_i32, %c0_i32_0 : i32, i32
  }
  func.func @transform_2(%arg0: i32) -> (i32, i32) {
    %c0_i32 = arith.constant 0 : i32
    %c0_i32_0 = arith.constant 0 : i32
    %c0_i32_1 = arith.constant 0 : i32
    return %c0_i32, %c0_i32_0 : i32, i32
  }
  func.func @transform_3(%arg0: i32) -> (i32, i32) {
    %c0_i32 = arith.constant 0 : i32
    %c0_i32_0 = arith.constant 0 : i32
    return %arg0, %c0_i32 : i32, i32
  }
}

</mosaic_0001>

<llo_original>
// kernel: tpu_custom_call.1
$region0: #{tpu_custom_call.1}
  #allocation0 [shape = 'u32[]', space=smem, size = 0x4, offset = 0x4, fixed_abs, tag = 'smem constant byte address 0x4 - core index']
  #allocation1 [shape = 'u32[144,128]{1,0:T(1,128)}', space=vmem, size = 0x12000, scoped, tag = 'internal scratch']
  %s0 = inlined_call_operand.hbm [shape: f32[16,32], index: 0, kind: input, shape index: {}]
  %s1 = inlined_call_operand.hbm [shape: f32[32,64], index: 1, kind: input, shape index: {}]
  %s2 = inlined_call_operand.vmem [shape: f32[1,64], index: 2, kind: input, shape index: {}]
  %s3 = inlined_call_operand.hbm [shape: f32[16,64], index: 3, kind: output, shape index: {}]
  %s4 = sld [smem:[#allocation0]]
  $region30: #{tpu_custom_call.1} parent=0
    _
  %s6 = ssub.s32 1, %s4
  %s7 = scalar_select 0, %s6, %s4
  $region1: #{tpu_custom_call.1} parent=0
    #allocation2 [shape = 'u8[8192]{0}', space=vmem, size = 0x2000, scoped, tag = 'input window, operand 0, single buffered']
    #allocation3 [shape = 's32[1]{0}', space=sflag, size = 0x4, scoped, tag = 'scoped memory for tpu_custom_call.1']
    #allocation4 [shape = 's32[1]{0}', space=sflag, size = 0x4, scoped, tag = 'scoped memory for tpu_custom_call.1']
    #allocation5 [shape = 'u8[16384]{0}', space=vmem, size = 0x4000, scoped, tag = 'input window, operand 1, single buffered']
    #allocation6 [shape = 's32[1]{0}', space=sflag, size = 0x4, scoped, tag = 'scoped memory for tpu_custom_call.1']
    #allocation7 [shape = 'u8[8192]{0}', space=vmem, size = 0x2000, scoped, tag = 'output window, operand 0, single buffered']
    %8 = vsyncpa [#allocation3], 0
    %9 = vsyncpa [#allocation6], 0
    %10 = vsyncpa [#allocation4], 0
    // Predicated region
    $region2: #{tpu_custom_call.1} parent=1 // pred_check
      _
    $region3: #{tpu_custom_call.1} parent=1 // pred_check_branch
      %12 = sbr.rel (0) target = $region5
    $region4: #{tpu_custom_call.1} parent=1 // pred_region
      %s14 = ssub.s32 256, 256
      %15 = vsyncadd [#allocation3], %s14
      %s16 = sshll.u32 [#allocation2], 4
      %s17 = int_to_ptr.vmem [resolvable:$true] %s16
      %22 = dma.hbm_to_vmem [thread:$0]  %s0, 256, %s17, [#allocation3], 128, 128, 8
    $region5: #{tpu_custom_call.1} parent=1 // pred_fallthru
      _
    // Predicated region
    $region6: #{tpu_custom_call.1} parent=1 // pred_check
      _
    $region7: #{tpu_custom_call.1} parent=1 // pred_check_branch
      %24 = sbr.rel (0) target = $region9
    $region8: #{tpu_custom_call.1} parent=1 // pred_region
      %s26 = ssub.s32 512, 512
      %27 = vsyncadd [#allocation6], %s26
      %s28 = sshll.u32 [#allocation5], 4
      %s29 = int_to_ptr.vmem [resolvable:$true] %s28
      %34 = dma.hbm_to_vmem [thread:$0]  %s1, 512, %s29, [#allocation6], 128, 128, 8
    $region9: #{tpu_custom_call.1} parent=1 // pred_fallthru
      _
    // Predicated region
    $region10: #{tpu_custom_call.1} parent=1 // pred_check
      _
    $region11: #{tpu_custom_call.1} parent=1 // pred_check_branch
      %36 = sbr.rel (0) target = $region13
    $region12: #{tpu_custom_call.1} parent=1 // pred_region
      _
    $region13: #{tpu_custom_call.1} parent=1 // pred_fallthru
      _
    // Predicated region
    $region14: #{tpu_custom_call.1} parent=1 // pred_check
      _
    $region15: #{tpu_custom_call.1} parent=1 // pred_check_branch
      %38 = sbr.rel (0) target = $region17
    $region16: #{tpu_custom_call.1} parent=1 // pred_region
      %39 = dma.done [#allocation3], 256
    $region17: #{tpu_custom_call.1} parent=1 // pred_fallthru
      _
    // Predicated region
    $region18: #{tpu_custom_call.1} parent=1 // pred_check
      _
    $region19: #{tpu_custom_call.1} parent=1 // pred_check_branch
      %41 = sbr.rel (0) target = $region21
    $region20: #{tpu_custom_call.1} parent=1 // pred_region
      %42 = dma.done [#allocation6], 512
    $region21: #{tpu_custom_call.1} parent=1 // pred_fallthru
      _
    %v43 = vld [vmem:[#allocation2] sm:$0xff]
    %v44 = vld [vmem:[#allocation2 + $0x8] sm:$0xff]
    %v45 = vld [vmem:[#allocation5] sm:$0xff]
    %v46 = vld [vmem:[#allocation5 + $0x8] sm:$0xff]
    %v47 = vld [vmem:[#allocation5 + $0x10] sm:$0xff]
    %v48 = vld [vmem:[#allocation5 + $0x18] sm:$0xff]
    %v49 = vld [vmem:[%s2] sm:$0x1]
    %v51 = vlaneseq
    %v52 = vshrl.u32 %v51, 7
    %v53 = vsub.s32 0, %v52
    %v54 = vrot.slane %v49, %v53
    %vm56 = vcmask 261120
    %v58 = vsel %vm56, %v43, 0
    %v61 = vsel %vm56, %v44, 0
    %63 = vmatprep.subr.mxu0 0.0
    %64 = vmatpush1.msra.mxu0 0.0
    %65 = vmatprep.subr.mxu0 0.0
    %66 = vmatpush1.msra.mxu0 0.0
    %67 = vmatprep.subr.mxu0 0.0
    %68 = vmatpush1.msra.mxu0 0.0
    %69 = vmatprep.subr.mxu0 0.0
    %70 = vmatpush1.msra.mxu0 0.0
    %71 = vmatprep.subr.mxu0 0.0
    %72 = vmatpush1.msra.mxu0 0.0
    %73 = vmatprep.subr.mxu0 0.0
    %74 = vmatpush1.msra.mxu0 0.0
    %75 = vmatprep.subr.mxu0 0.0
    %76 = vmatpush1.msra.mxu0 0.0
    %77 = vmatprep.subr.mxu0 0.0
    %78 = vmatpush1.msra.mxu0 0.0
    %79 = vmatprep.subr.mxu0 0.0
    %80 = vmatpush1.msra.mxu0 0.0
    %81 = vmatprep.subr.mxu0 0.0
    %82 = vmatpush1.msra.mxu0 0.0
    %83 = vmatprep.subr.mxu0 0.0
    %84 = vmatpush1.msra.mxu0 0.0
    %85 = vmatprep.subr.mxu0 0.0
    %86 = vmatpush1.msra.mxu0 0.0
    %87 = vmatprep.subr.mxu0 0.0
    %88 = vmatpush1.msra.mxu0 %v48
    %89 = vmatprep.subr.mxu0 0.0
    %90 = vmatpush1.msra.mxu0 %v47
    %91 = vmatprep.subr.mxu0 0.0
    %92 = vmatpush1.msra.mxu0 %v46
    %93 = vmatprep.subr.mxu0 0.0
    %94 = vmatpush1.msra.mxu0 %v45
    %95 = vmatprep.subr.mxu0 0.0
    %96 = vmatpush2.msra.mxu0 0.0
    %97 = vmatprep.subr.mxu0 0.0
    %98 = vmatpush2.msra.mxu0 0.0
    %99 = vmatprep.subr.mxu0 0.0
    %100 = vmatpush2.msra.mxu0 0.0
    %101 = vmatprep.subr.mxu0 0.0
    %102 = vmatpush2.msra.mxu0 0.0
    %103 = vmatprep.subr.mxu0 0.0
    %104 = vmatpush2.msra.mxu0 0.0
    %105 = vmatprep.subr.mxu0 0.0
    %106 = vmatpush2.msra.mxu0 0.0
    %107 = vmatprep.subr.mxu0 0.0
    %108 = vmatpush2.msra.mxu0 0.0
    %109 = vmatprep.subr.mxu0 0.0
    %110 = vmatpush2.msra.mxu0 0.0
    %111 = vmatprep.subr.mxu0 0.0
    %112 = vmatpush2.msra.mxu0 0.0
    %113 = vmatprep.subr.mxu0 0.0
    %114 = vmatpush2.msra.mxu0 0.0
    %115 = vmatprep.subr.mxu0 0.0
    %116 = vmatpush2.msra.mxu0 0.0
    %117 = vmatprep.subr.mxu0 0.0
    %118 = vmatpush2.msra.mxu0 0.0
    %119 = vmatprep.subr.mxu0 0.0
    %120 = vmatpush2.msra.mxu0 0.0
    %121 = vmatprep.subr.mxu0 0.0
    %122 = vmatpush2.msra.mxu0 0.0
    %123 = vmatprep.subr.mxu0 0.0
    %124 = vmatpush2.msra.mxu0 0.0
    %125 = vmatprep.subr.mxu0 0.0
    %126 = vmatpush2.msra.mxu0 0.0
    %127 = vmatprep.mubr.f32.mxu0 0.0
    %128 = vmatmul.mubr.f32.gmra.mxu0 %v58
    %v129 = vpop.f32.mrf.mxu0
    %v130 = vadd.f32 %v54, %v129
    %v131 = vpop.f32.mrf.mxu0
    %132 = vmatprep.mubr.f32.mxu0 0.0
    %133 = vmatmul.mubr.f32.gmra.mxu0 %v61
    %v134 = vpop.f32.mrf.mxu0
    %v135 = vadd.f32 %v54, %v134
    %v136 = vpop.f32.mrf.mxu0
    %137 = vdwg.mxu0
    %v138 = vmax.f32 %v130, 0.0
    %v139 = vmax.f32 %v135, 0.0
    %vm140 = vcmask 523264
    %141 = vst.msk [vmem:[#allocation7] sm:$0xff] %vm140, %v138
    %142 = vst.msk [vmem:[#allocation7 + $0x8] sm:$0xff] %vm140, %v139
    // Predicated region
    $region22: #{tpu_custom_call.1} parent=1 // pred_check
      _
    $region23: #{tpu_custom_call.1} parent=1 // pred_check_branch
      %144 = sbr.rel (0) target = $region25
    $region24: #{tpu_custom_call.1} parent=1 // pred_region
      %s146 = ssub.s32 256, 256
      %147 = vsyncadd [#allocation4], %s146
      %s148 = sshll.u32 [#allocation7], 4
      %s149 = int_to_ptr.vmem [resolvable:$true] %s148
      %154 = dma.vmem_to_hbm [thread:$0]  %s149, 256, %s3, [#allocation4], 128, 128, 8
    $region25: #{tpu_custom_call.1} parent=1 // pred_fallthru
      _
    // Predicated region
    $region26: #{tpu_custom_call.1} parent=1 // pred_check
      _
    $region27: #{tpu_custom_call.1} parent=1 // pred_check_branch
      %156 = sbr.rel (0) target = $region29
    $region28: #{tpu_custom_call.1} parent=1 // pred_region
      %157 = dma.done [#allocation4], 256
    $region29: #{tpu_custom_call.1} parent=1 // pred_fallthru
      _
    %158 = vsyncpa [#allocation3], 1
    %159 = vsyncpa [#allocation6], 1
    %160 = vsyncpa [#allocation4], 1

// kernel: tpu_custom_call.1
$region0: #{tpu_custom_call.1}
  #allocation0 [shape = 'u32[]', space=smem, size = 0x4, offset = 0x4, fixed_abs, tag = 'smem constant byte address 0x4 - core index']
  #allocation1 [shape = 'u32[144,128]{1,0:T(1,128)}', space=vmem, size = 0x12000, scoped, tag = 'internal scratch']
  %s0 = inlined_call_operand.hbm [shape: f32[16,32], index: 0, kind: input, shape index: {}]
  %s1 = inlined_call_operand.hbm [shape: f32[32,64], index: 1, kind: input, shape index: {}]
  %s2 = inlined_call_operand.vmem [shape: f32[1,64], index: 2, kind: input, shape index: {}]
  %s3 = inlined_call_operand.hbm [shape: f32[16,64], index: 3, kind: output, shape index: {}]
  %s4 = sld [smem:[#allocation0]]
  $region30: #{tpu_custom_call.1} parent=0
    _
  %s6 = ssub.s32 1, %s4
  %s7 = scalar_select 0, %s6, %s4
  $region1: #{tpu_custom_call.1} parent=0
    #allocation2 [shape = 'u8[8192]{0}', space=vmem, size = 0x2000, scoped, tag = 'input window, operand 0, single buffered']
    #allocation3 [shape = 's32[1]{0}', space=sflag, size = 0x4, scoped, tag = 'scoped memory for tpu_custom_call.1']
    #allocation4 [shape = 's32[1]{0}', space=sflag, size = 0x4, scoped, tag = 'scoped memory for tpu_custom_call.1']
    #allocation5 [shape = 'u8[16384]{0}', space=vmem, size = 0x4000, scoped, tag = 'input window, operand 1, single buffered']
    #allocation6 [shape = 's32[1]{0}', space=sflag, size = 0x4, scoped, tag = 'scoped memory for tpu_custom_call.1']
    #allocation7 [shape = 'u8[8192]{0}', space=vmem, size = 0x2000, scoped, tag = 'output window, operand 0, single buffered']
    %8 = vsyncpa [#allocation3], 0
    %9 = vsyncpa [#allocation6], 0
    %10 = vsyncpa [#allocation4], 0
    // Predicated region
    $region2: #{tpu_custom_call.1} parent=1 // pred_check
      _
    $region3: #{tpu_custom_call.1} parent=1 // pred_check_branch
      %12 = sbr.rel (0) target = $region5
    $region4: #{tpu_custom_call.1} parent=1 // pred_region
      %s14 = ssub.s32 256, 256
      %15 = vsyncadd [#allocation3], %s14
      %s16 = sshll.u32 [#allocation2], 4
      %s17 = int_to_ptr.vmem [resolvable:$true] %s16
      %22 = dma.hbm_to_vmem [thread:$0]  %s0, 256, %s17, [#allocation3], 128, 128, 8
    $region5: #{tpu_custom_call.1} parent=1 // pred_fallthru
      _
    // Predicated region
    $region6: #{tpu_custom_call.1} parent=1 // pred_check
      _
    $region7: #{tpu_custom_call.1} parent=1 // pred_check_branch
      %24 = sbr.rel (0) target = $region9
    $region8: #{tpu_custom_call.1} parent=1 // pred_region
      %s26 = ssub.s32 512, 512
      %27 = vsyncadd [#allocation6], %s26
      %s28 = sshll.u32 [#allocation5], 4
      %s29 = int_to_ptr.vmem [resolvable:$true] %s28
      %34 = dma.hbm_to_vmem [thread:$0]  %s1, 512, %s29, [#allocation6], 128, 128, 8
    $region9: #{tpu_custom_call.1} parent=1 // pred_fallthru
      _
    // Predicated region
    $region10: #{tpu_custom_call.1} parent=1 // pred_check
      _
    $region11: #{tpu_custom_call.1} parent=1 // pred_check_branch
      %36 = sbr.rel (0) target = $region13
    $region12: #{tpu_custom_call.1} parent=1 // pred_region
      _
    $region13: #{tpu_custom_call.1} parent=1 // pred_fallthru
      _
    // Predicated region
    $region14: #{tpu_custom_call.1} parent=1 // pred_check
      _
    $region15: #{tpu_custom_call.1} parent=1 // pred_check_branch
      %38 = sbr.rel (0) target = $region17
    $region16: #{tpu_custom_call.1} parent=1 // pred_region
      %39 = dma.done [#allocation3], 256
    $region17: #{tpu_custom_call.1} parent=1 // pred_fallthru
      _
    // Predicated region
    $region18: #{tpu_custom_call.1} parent=1 // pred_check
      _
    $region19: #{tpu_custom_call.1} parent=1 // pred_check_branch
      %41 = sbr.rel (0) target = $region21
    $region20: #{tpu_custom_call.1} parent=1 // pred_region
      %42 = dma.done [#allocation6], 512
    $region21: #{tpu_custom_call.1} parent=1 // pred_fallthru
      _
    %v43 = vld [vmem:[#allocation2] sm:$0xff]
    %v44 = vld [vmem:[#allocation2 + $0x8] sm:$0xff]
    %v45 = vld [vmem:[#allocation5] sm:$0xff]
    %v46 = vld [vmem:[#allocation5 + $0x8] sm:$0xff]
    %v47 = vld [vmem:[#allocation5 + $0x10] sm:$0xff]
    %v48 = vld [vmem:[#allocation5 + $0x18] sm:$0xff]
    %v49 = vld [vmem:[%s2] sm:$0x1]
    %v51 = vlaneseq
    %v52 = vshrl.u32 %v51, 7
    %v53 = vsub.s32 0, %v52
    %v54 = vrot.slane %v49, %v53
    %vm56 = vcmask 261120
    %v58 = vsel %vm56, %v43, 0
    %v61 = vsel %vm56, %v44, 0
    %63 = vmatprep.subr.mxu0 0.0
    %64 = vmatpush1.msra.mxu0 0.0
    %65 = vmatprep.subr.mxu0 0.0
    %66 = vmatpush1.msra.mxu0 0.0
    %67 = vmatprep.subr.mxu0 0.0
    %68 = vmatpush1.msra.mxu0 0.0
    %69 = vmatprep.subr.mxu0 0.0
    %70 = vmatpush1.msra.mxu0 0.0
    %71 = vmatprep.subr.mxu0 0.0
    %72 = vmatpush1.msra.mxu0 0.0
    %73 = vmatprep.subr.mxu0 0.0
    %74 = vmatpush1.msra.mxu0 0.0
    %75 = vmatprep.subr.mxu0 0.0
    %76 = vmatpush1.msra.mxu0 0.0
    %77 = vmatprep.subr.mxu0 0.0
    %78 = vmatpush1.msra.mxu0 0.0
    %79 = vmatprep.subr.mxu0 0.0
    %80 = vmatpush1.msra.mxu0 0.0
    %81 = vmatprep.subr.mxu0 0.0
    %82 = vmatpush1.msra.mxu0 0.0
    %83 = vmatprep.subr.mxu0 0.0
    %84 = vmatpush1.msra.mxu0 0.0
    %85 = vmatprep.subr.mxu0 0.0
    %86 = vmatpush1.msra.mxu0 0.0
    %87 = vmatprep.subr.mxu0 0.0
    %88 = vmatpush1.msra.mxu0 %v48
    %89 = vmatprep.subr.mxu0 0.0
    %90 = vmatpush1.msra.mxu0 %v47
    %91 = vmatprep.subr.mxu0 0.0
    %92 = vmatpush1.msra.mxu0 %v46
    %93 = vmatprep.subr.mxu0 0.0
    %94 = vmatpush1.msra.mxu0 %v45
    %95 = vmatprep.subr.mxu0 0.0
    %96 = vmatpush2.msra.mxu0 0.0
    %97 = vmatprep.subr.mxu0 0.0
    %98 = vmatpush2.msra.mxu0 0.0
    %99 = vmatprep.subr.mxu0 0.0
    %100 = vmatpush2.msra.mxu0 0.0
    %101 = vmatprep.subr.mxu0 0.0
    %102 = vmatpush2.msra.mxu0 0.0
    %103 = vmatprep.subr.mxu0 0.0
    %104 = vmatpush2.msra.mxu0 0.0
    %105 = vmatprep.subr.mxu0 0.0
    %106 = vmatpush2.msra.mxu0 0.0
    %107 = vmatprep.subr.mxu0 0.0
    %108 = vmatpush2.msra.mxu0 0.0
    %109 = vmatprep.subr.mxu0 0.0
    %110 = vmatpush2.msra.mxu0 0.0
    %111 = vmatprep.subr.mxu0 0.0
    %112 = vmatpush2.msra.mxu0 0.0
    %113 = vmatprep.subr.mxu0 0.0
    %114 = vmatpush2.msra.mxu0 0.0
    %115 = vmatprep.subr.mxu0 0.0
    %116 = vmatpush2.msra.mxu0 0.0
    %117 = vmatprep.subr.mxu0 0.0
    %118 = vmatpush2.msra.mxu0 0.0
    %119 = vmatprep.subr.mxu0 0.0
    %120 = vmatpush2.msra.mxu0 0.0
    %121 = vmatprep.subr.mxu0 0.0
    %122 = vmatpush2.msra.mxu0 0.0
    %123 = vmatprep.subr.mxu0 0.0
    %124 = vmatpush2.msra.mxu0 0.0
    %125 = vmatprep.subr.mxu0 0.0
    %126 = vmatpush2.msra.mxu0 0.0
    %127 = vmatprep.mubr.f32.mxu0 0.0
    %128 = vmatmul.mubr.f32.gmra.mxu0 %v58
    %v129 = vpop.f32.mrf.mxu0
    %v130 = vadd.f32 %v54, %v129
    %v131 = vpop.f32.mrf.mxu0
    %132 = vmatprep.mubr.f32.mxu0 0.0
    %133 = vmatmul.mubr.f32.gmra.mxu0 %v61
    %v134 = vpop.f32.mrf.mxu0
    %v135 = vadd.f32 %v54, %v134
    %v136 = vpop.f32.mrf.mxu0
    %137 = vdwg.mxu0
    %v138 = vmax.f32 %v130, 0.0
    %v139 = vmax.f32 %v135, 0.0
    %vm140 = vcmask 523264
    %141 = vst.msk [vmem:[#allocation7] sm:$0xff] %vm140, %v138
    %142 = vst.msk [vmem:[#allocation7 + $0x8] sm:$0xff] %vm140, %v139
    // Predicated region
    $region22: #{tpu_custom_call.1} parent=1 // pred_check
      _
    $region23: #{tpu_custom_call.1} parent=1 // pred_check_branch
      %144 = sbr.rel (0) target = $region25
    $region24: #{tpu_custom_call.1} parent=1 // pred_region
      %s146 = ssub.s32 256, 256
      %147 = vsyncadd [#allocation4], %s146
      %s148 = sshll.u32 [#allocation7], 4
      %s149 = int_to_ptr.vmem [resolvable:$true] %s148
      %154 = dma.vmem_to_hbm [thread:$0]  %s149, 256, %s3, [#allocation4], 128, 128, 8
    $region25: #{tpu_custom_call.1} parent=1 // pred_fallthru
      _
    // Predicated region
    $region26: #{tpu_custom_call.1} parent=1 // pred_check
      _
    $region27: #{tpu_custom_call.1} parent=1 // pred_check_branch
      %156 = sbr.rel (0) target = $region29
    $region28: #{tpu_custom_call.1} parent=1 // pred_region
      %157 = dma.done [#allocation4], 256
    $region29: #{tpu_custom_call.1} parent=1 // pred_fallthru
      _
    %158 = vsyncpa [#allocation3], 1
    %159 = vsyncpa [#allocation6], 1
    %160 = vsyncpa [#allocation4], 1

</llo_original>
